<compile_context>
chip_gen: v7x
topology: tpu7x:2x2x1
jax: 0.10.0
libtpu: 0.0.40
codegen_flags: <defaults>
</compile_context>

<pallas_src>
import jax
import jax.numpy as jnp
from jax.experimental import pallas as pl
from jax.experimental.pallas import tpu as pltpu

# ---- problem sizes (small, consistent with the module) -----------------------------
B = 8          # batch
DIN = 32       # encoder input features
K = 16         # number of discrete latent categories (encoder score dim)
TOPK = 3       # encoder.topk
DDEC = 16      # decoder_input features
H = 32         # decoder hidden / embedding dim
C = 10         # number of label classes
NCAND = TOPK + 1                # topk candidates + 1 conditional sample (MAP == top-1)
ENC_ENT_COEFF = 0.1             # encoder_entropy_coeff
SLAB_LANES = 128                # lane-dense slab width
PROWS = 32                      # packed-parameter slab rows (= max(DIN, K+DDEC, H))

# activation-slab lane layout
A_ENC, A_DEC, A_GUM, A_LAB = 0, DIN, 48, 64
# parameter-slab lane layout
P_WE, P_WXE, P_WD, P_BE, P_BD = 0, 16, 48, 58, 74
# output-slab lane layout: probs in 0..K-1, then [full, map_loss, mean_ent, acc_mean]
O_FULL, O_MAP, O_ENT, O_ACC = K, K + 1, K + 2, K + 3

_VMEM = pl.BlockSpec(memory_space=pltpu.MemorySpace.VMEM)


# ===================================================================================
# Single fused kernel: encoder -> top-k + Gumbel conditional sample -> batched decoder
#                      + vectorized CE loss -> Sum&Sample assembly -> packed output slab
# ===================================================================================
def _fused_kernel(act_ref, par_ref, out_ref):
    A = act_ref[...]                               # (B, 128) packed activations
    P = par_ref[...]                               # (PROWS, 128) packed parameters

    x_enc = A[:, A_ENC:A_ENC + DIN]                # (B, DIN)
    x_dec = A[:, A_DEC:A_DEC + DDEC]               # (B, DDEC)
    g     = A[:, A_GUM:A_GUM + K]                  # (B, K) pre-drawn Gumbel noise
    lab_f = A[:, A_LAB:A_LAB + 1]                  # (B, 1) labels (exact small ints as f32)

    w_e  = P[0:DIN, P_WE:P_WE + K]                 # (DIN, K)
    w_xe = P[0:K + DDEC, P_WXE:P_WXE + H]          # (K+DDEC, H) = [emb; w_x] pre-fused
    w_d  = P[0:H, P_WD:P_WD + C]                   # (H, C)
    b_e  = P[0:1, P_BE:P_BE + K]                   # (1, K)
    b_d  = P[0:1, P_BD:P_BD + C]                   # (1, C)

    # ------------------------------ encoder ------------------------------
    scores = jnp.dot(x_enc, w_e, preferred_element_type=jnp.float32) + b_e   # (B, K)
    m_enc = jnp.max(scores, axis=-1, keepdims=True)
    s = scores - m_enc
    ex = jnp.exp(s)
    denom = jnp.sum(ex, axis=-1, keepdims=True)
    logp = s - jnp.log(denom)                              # log_softmax
    probs = ex / denom                                     # softmax ('distr' output)
    ent = -jnp.sum(probs * logp, axis=-1, keepdims=True)   # Categorical entropy, (B,1)

    colf_k = jax.lax.broadcasted_iota(jnp.int32, (B, K), 1).astype(jnp.float32)

    # iterative top-k over the probabilities (torch.topk is descending); the selected
    # prob is exactly the remaining row max and its logp is log(row max) -> no masked
    # reductions on the critical path.
    work = probs
    mask = jnp.zeros((B, K), jnp.float32)
    topk_oh, pr_sel, lp_sel = [], [], []
    for _ in range(TOPK):
        row_max = jnp.max(work, axis=-1, keepdims=True)
        idx = jnp.min(jnp.where(work >= row_max, colf_k, float(K)),
                      axis=-1, keepdims=True)
        oh = (colf_k == idx).astype(jnp.float32)
        topk_oh.append(oh)
        pr_sel.append(row_max)                     # prob of selected category
        lp_sel.append(jnp.log(row_max))            # logp of selected category (EUP slot)
        mask = mask + oh                           # concentrated_mask
        work = jnp.where(oh > 0.0, -1.0, work)

    # sampled_weight = leftover probability mass (reuses the row maxes)
    sw = jnp.maximum(1.0 - (pr_sel[0] + pr_sel[1] + pr_sel[2]), 0.0)   # (B,1)

    # conditional sample from the leftover mass: Gumbel-max directly on masked logp
    # (renormalization only shifts every lane by a constant -> same argmax).
    gscore = jnp.where(mask > 0.0, -1e30, logp) + g
    gmax = jnp.max(gscore, axis=-1, keepdims=True)
    cidx = jnp.min(jnp.where(gscore >= gmax, colf_k, float(K)),
                   axis=-1, keepdims=True)
    cond_oh = (colf_k == cidx).astype(jnp.float32)
    cond_lp = jnp.sum(cond_oh * logp, axis=-1, keepdims=True)

    # ------------------ decoder: all NCAND candidates, ONE fused hidden matmul ----------
    zoh_all = jnp.concatenate(topk_oh + [cond_oh], axis=0)         # (NCAND*B, K)
    dec_all = jnp.concatenate([x_dec] * NCAND, axis=0)             # (NCAND*B, DDEC)
    inp = jnp.concatenate([zoh_all, dec_all], axis=1)              # (NCAND*B, K+DDEC)
    h = jnp.tanh(jnp.dot(inp, w_xe, preferred_element_type=jnp.float32))
    logits = jnp.dot(h, w_d, preferred_element_type=jnp.float32) + b_d     # (NCAND*B, C)

    m_dec = jnp.max(logits, axis=-1, keepdims=True)
    sd = logits - m_dec
    logp_dec = sd - jnp.log(jnp.sum(jnp.exp(sd), axis=-1, keepdims=True))

    # vectorized per-candidate cross entropy: one (NCAND*B, C) reduction
    colf_c = jax.lax.broadcasted_iota(jnp.int32, (B, C), 1).astype(jnp.float32)
    laboh = (colf_c == lab_f).astype(jnp.float32)                  # (B, C), built in-kernel
    laboh_all = jnp.concatenate([laboh] * NCAND, axis=0)           # (NCAND*B, C)
    ce_all = -jnp.sum(laboh_all * logp_dec, axis=-1, keepdims=True)  # (NCAND*B, 1)

    # accuracy of the MAP (top-1) candidate only; reuse the log-softmax row max
    pred = jnp.min(jnp.where(logits[0:B] >= m_dec[0:B], colf_c, float(C)),
                   axis=-1, keepdims=True)
    acc = (pred == lab_f).astype(jnp.float32)                      # (B, 1)

    # ------------------ Sum&Sample estimator assembly (baseline = 0.0) ------------------
    summed = jnp.zeros((B, 1), jnp.float32)
    for ii in range(TOPK):
        l_i = ce_all[ii * B:(ii + 1) * B]
        summed = summed + (l_i * lp_sel[ii] + l_i) * pr_sel[ii]
    l_c = ce_all[TOPK * B:NCAND * B]
    loss_vec = (l_c * cond_lp + l_c) * sw + summed                 # (B, 1)

    # all four batch means with a single sublane reduction
    stats = jnp.concatenate([loss_vec, ent, ce_all[0:B], acc], axis=1)   # (B, 4)
    means = jnp.sum(stats, axis=0, keepdims=True) * (1.0 / float(B))     # (1, 4)
    full = means[:, 0:1] - ENC_ENT_COEFF * means[:, 1:2]                  # loss.mean() + ent term
    scal = jnp.concatenate([full, means[:, 2:3], means[:, 1:2], means[:, 3:4]], axis=1)

    # single lane-dense (B, 128) output slab: probs | scalars | zero padding
    out_ref[...] = jnp.concatenate(
        [probs,
         jnp.broadcast_to(scal, (B, 4)),
         jnp.zeros((B, SLAB_LANES - K - 4), jnp.float32)], axis=1)


def pack_params(params):
    """Pack all decoder/encoder weights into one (PROWS, 128) f32 slab (done once)."""
    p = jnp.zeros((PROWS, SLAB_LANES), jnp.float32)
    p = p.at[0:DIN, P_WE:P_WE + K].set(params["w_e"])
    w_xe = jnp.concatenate([params["emb"], params["w_x"]], axis=0)   # (K+DDEC, H)
    p = p.at[0:K + DDEC, P_WXE:P_WXE + H].set(w_xe)
    p = p.at[0:H, P_WD:P_WD + C].set(params["w_d"])
    p = p.at[0:1, P_BE:P_BE + K].set(params["b_e"])
    p = p.at[0:1, P_BD:P_BD + C].set(params["b_d"])
    return p


def sum_and_sample_forward(packed_params, encoder_input, decoder_input, labels, rng_key):
    # Gumbel noise drawn outside the kernel (TPU-PRNG primitives have no interpret lowering)
    g = jax.random.gumbel(rng_key, (B, K), dtype=jnp.float32)

    # pack activations + noise + labels into one (B, 128) slab -> one input DMA
    act = jnp.zeros((B, SLAB_LANES), jnp.float32)
    act = act.at[:, A_ENC:A_ENC + DIN].set(encoder_input)
    act = act.at[:, A_DEC:A_DEC + DDEC].set(decoder_input)
    act = act.at[:, A_GUM:A_GUM + K].set(g)
    act = act.at[:, A_LAB].set(labels.astype(jnp.float32))

    # NOTE: a single tiny launch leaves a v7x second TensorCore idle; if many independent
    # estimator instances run per step, add a leading "parallel" grid axis over instances.
    slab = pl.pallas_call(
        _fused_kernel,
        out_shape=jax.ShapeDtypeStruct((B, SLAB_LANES), jnp.float32),
        in_specs=[_VMEM, _VMEM],
        out_specs=_VMEM,
    )(act, packed_params)

    probs = slab[:, 0:K]
    logs = {
        "acc": slab[0, O_ACC],
        "loss": slab[0, O_MAP],
        "encoder_entropy": slab[0, O_ENT],
        "distr": probs,
    }
    return {"loss": slab[0, O_FULL], "log": logs}


# TODO(synk): the 'runavg' baseline (self.mean_baseline / self.n_points) is Python-side
# mutable training state with no clean functional/Pallas equivalent; this script uses
# baseline_type='none' (baseline = 0.0), one of the module's supported branches.

if __name__ == "__main__":
    key = jax.random.PRNGKey(0)
    k_x, k_d, k_lab, k_we, k_emb, k_wx, k_wd, k_g = jax.random.split(key, 8)

    encoder_input = jax.random.normal(k_x, (B, DIN), dtype=jnp.float32)
    decoder_input = jax.random.normal(k_d, (B, DDEC), dtype=jnp.float32)
    labels = jax.random.randint(k_lab, (B,), 0, C, dtype=jnp.int32)

    params = {
        "w_e": 0.3 * jax.random.normal(k_we, (DIN, K), dtype=jnp.float32),
        "b_e": jnp.zeros((1, K), dtype=jnp.float32),
        "emb": 0.3 * jax.random.normal(k_emb, (K, H), dtype=jnp.float32),
        "w_x": 0.3 * jax.random.normal(k_wx, (DDEC, H), dtype=jnp.float32),
        "w_d": 0.3 * jax.random.normal(k_wd, (H, C), dtype=jnp.float32),
        "b_d": jnp.zeros((1, C), dtype=jnp.float32),
    }
    packed = pack_params(params)   # done once, outside the hot path

    out = jax.jit(sum_and_sample_forward)(packed, encoder_input, decoder_input, labels, k_g)
    out = jax.block_until_ready(out)

    assert out["loss"].shape == ()
    assert out["log"]["distr"].shape == (B, K)
    assert bool(jnp.isfinite(out["loss"]))
    assert bool(jnp.all(jnp.isfinite(out["log"]["distr"])))
    assert bool(jnp.isfinite(out["log"]["acc"]))
    assert bool(jnp.isfinite(out["log"]["encoder_entropy"]))
    # probabilities must sum to ~1 per row
    assert bool(jnp.all(jnp.abs(jnp.sum(out["log"]["distr"], axis=-1) - 1.0) < 1e-5))
    print("KERNEL_OK")
</pallas_src>

<mosaic_0001>
module attributes {stable_mosaic.version = 11 : i64} {
  func.func @_fused_kernel(%arg0: memref<8x128xf32, #tpu.memory_space<vmem>>, %arg1: memref<32x128xf32, #tpu.memory_space<vmem>>, %arg2: memref<8x128xf32, #tpu.memory_space<vmem>>) attributes {dimension_semantics = [], scalar_prefetch = 0 : i64, scratch_operands = 0 : i64, tpu.core_type = #tpu.core_type<tc>} {
    %c0 = arith.constant 0 : index
    %c0_0 = arith.constant 0 : index
    %0 = vector.load %arg0[%c0, %c0_0] : memref<8x128xf32, #tpu.memory_space<vmem>>, vector<8x128xf32>
    %c0_1 = arith.constant 0 : index
    %c0_2 = arith.constant 0 : index
    %1 = vector.load %arg1[%c0_1, %c0_2] : memref<32x128xf32, #tpu.memory_space<vmem>>, vector<32x128xf32>
    %2 = vector.extract_strided_slice %0 {offsets = [0, 0], sizes = [8, 32], strides = [1, 1]} : vector<8x128xf32> to vector<8x32xf32>
    %3 = vector.extract_strided_slice %0 {offsets = [0, 32], sizes = [8, 16], strides = [1, 1]} : vector<8x128xf32> to vector<8x16xf32>
    %4 = vector.extract_strided_slice %0 {offsets = [0, 48], sizes = [8, 16], strides = [1, 1]} : vector<8x128xf32> to vector<8x16xf32>
    %5 = vector.extract_strided_slice %0 {offsets = [0, 64], sizes = [8, 1], strides = [1, 1]} : vector<8x128xf32> to vector<8x1xf32>
    %6 = vector.extract_strided_slice %1 {offsets = [0, 0], sizes = [32, 16], strides = [1, 1]} : vector<32x128xf32> to vector<32x16xf32>
    %7 = vector.extract_strided_slice %1 {offsets = [0, 16], sizes = [32, 32], strides = [1, 1]} : vector<32x128xf32> to vector<32x32xf32>
    %8 = vector.extract_strided_slice %1 {offsets = [0, 48], sizes = [32, 10], strides = [1, 1]} : vector<32x128xf32> to vector<32x10xf32>
    %9 = vector.extract_strided_slice %1 {offsets = [0, 58], sizes = [1, 16], strides = [1, 1]} : vector<32x128xf32> to vector<1x16xf32>
    %10 = vector.extract_strided_slice %1 {offsets = [0, 74], sizes = [1, 10], strides = [1, 1]} : vector<32x128xf32> to vector<1x10xf32>
    %cst = arith.constant dense<0.000000e+00> : vector<8x16xf32>
    %11 = tpu.matmul %2, %6, %cst {dimension_numbers = #tpu.dot_dimension_numbers<[1], [0], [0], [1], [0, 0, 1, 1], [], []>} : vector<8x32xf32>, vector<32x16xf32>, vector<8x16xf32> -> vector<8x16xf32>
    %12 = vector.broadcast %9 : vector<1x16xf32> to vector<8x16xf32>
    %13 = arith.addf %11, %12 : vector<8x16xf32>
    %cst_3 = arith.constant dense<0xFF800000> : vector<8xf32>
    %14 = vector.multi_reduction <maximumf>, %13, %cst_3 [1] : vector<8x16xf32> to vector<8xf32>
    %15 = vector.shape_cast %14 : vector<8xf32> to vector<8x1xf32>
    %16 = vector.broadcast %15 : vector<8x1xf32> to vector<8x16xf32>
    %17 = arith.subf %13, %16 : vector<8x16xf32>
    %18 = math.exp %17 : vector<8x16xf32>
    %cst_4 = arith.constant dense<0.000000e+00> : vector<8xf32>
    %19 = vector.multi_reduction <add>, %18, %cst_4 [1] : vector<8x16xf32> to vector<8xf32>
    %20 = vector.shape_cast %19 : vector<8xf32> to vector<8x1xf32>
    %21 = math.log %20 : vector<8x1xf32>
    %22 = vector.broadcast %21 : vector<8x1xf32> to vector<8x16xf32>
    %23 = arith.subf %17, %22 : vector<8x16xf32>
    %24 = vector.broadcast %20 : vector<8x1xf32> to vector<8x16xf32>
    %25 = arith.divf %18, %24 : vector<8x16xf32>
    %26 = arith.mulf %25, %23 : vector<8x16xf32>
    %cst_5 = arith.constant dense<0.000000e+00> : vector<8xf32>
    %27 = vector.multi_reduction <add>, %26, %cst_5 [1] : vector<8x16xf32> to vector<8xf32>
    %28 = vector.shape_cast %27 : vector<8xf32> to vector<8x1xf32>
    %cst_6 = arith.constant 0.000000e+00 : f32
    %29 = vector.broadcast %cst_6 : f32 to vector<8x1xf32>
    %30 = arith.subf %29, %28 : vector<8x1xf32>
    %31 = tpu.iota {dimensions = array<i32: 1>} : vector<8x16xi32>
    %32 = arith.sitofp %31 : vector<8x16xi32> to vector<8x16xf32>
    %cst_7 = arith.constant 0.000000e+00 : f32
    %33 = vector.broadcast %cst_7 : f32 to vector<8x16xf32>
    %cst_8 = arith.constant dense<0xFF800000> : vector<8xf32>
    %34 = vector.multi_reduction <maximumf>, %25, %cst_8 [1] : vector<8x16xf32> to vector<8xf32>
    %35 = vector.shape_cast %34 : vector<8xf32> to vector<8x1xf32>
    %36 = vector.broadcast %35 : vector<8x1xf32> to vector<8x16xf32>
    %37 = arith.cmpf oge, %25, %36 : vector<8x16xf32>
    %cst_9 = arith.constant 1.600000e+01 : f32
    %38 = vector.broadcast %cst_9 : f32 to vector<8x16xf32>
    %39 = arith.select %37, %32, %38 : vector<8x16xi1>, vector<8x16xf32>
    %cst_10 = arith.constant dense<0x7F800000> : vector<8xf32>
    %40 = vector.multi_reduction <minimumf>, %39, %cst_10 [1] : vector<8x16xf32> to vector<8xf32>
    %41 = vector.shape_cast %40 : vector<8xf32> to vector<8x1xf32>
    %42 = vector.broadcast %41 : vector<8x1xf32> to vector<8x16xf32>
    %43 = arith.cmpf oeq, %32, %42 : vector<8x16xf32>
    %44 = arith.extui %43 : vector<8x16xi1> to vector<8x16xi32>
    %45 = arith.sitofp %44 : vector<8x16xi32> to vector<8x16xf32>
    %46 = math.log %35 : vector<8x1xf32>
    %47 = arith.addf %33, %45 : vector<8x16xf32>
    %cst_11 = arith.constant 0.000000e+00 : f32
    %48 = vector.broadcast %cst_11 : f32 to vector<8x16xf32>
    %49 = arith.cmpf ogt, %45, %48 : vector<8x16xf32>
    %cst_12 = arith.constant -1.000000e+00 : f32
    %50 = vector.broadcast %cst_12 : f32 to vector<8x16xf32>
    %51 = arith.select %49, %50, %25 : vector<8x16xi1>, vector<8x16xf32>
    %cst_13 = arith.constant dense<0xFF800000> : vector<8xf32>
    %52 = vector.multi_reduction <maximumf>, %51, %cst_13 [1] : vector<8x16xf32> to vector<8xf32>
    %53 = vector.shape_cast %52 : vector<8xf32> to vector<8x1xf32>
    %54 = vector.broadcast %53 : vector<8x1xf32> to vector<8x16xf32>
    %55 = arith.cmpf oge, %51, %54 : vector<8x16xf32>
    %cst_14 = arith.constant 1.600000e+01 : f32
    %56 = vector.broadcast %cst_14 : f32 to vector<8x16xf32>
    %57 = arith.select %55, %32, %56 : vector<8x16xi1>, vector<8x16xf32>
    %cst_15 = arith.constant dense<0x7F800000> : vector<8xf32>
    %58 = vector.multi_reduction <minimumf>, %57, %cst_15 [1] : vector<8x16xf32> to vector<8xf32>
    %59 = vector.shape_cast %58 : vector<8xf32> to vector<8x1xf32>
    %60 = vector.broadcast %59 : vector<8x1xf32> to vector<8x16xf32>
    %61 = arith.cmpf oeq, %32, %60 : vector<8x16xf32>
    %62 = arith.extui %61 : vector<8x16xi1> to vector<8x16xi32>
    %63 = arith.sitofp %62 : vector<8x16xi32> to vector<8x16xf32>
    %64 = math.log %53 : vector<8x1xf32>
    %65 = arith.addf %47, %63 : vector<8x16xf32>
    %cst_16 = arith.constant 0.000000e+00 : f32
    %66 = vector.broadcast %cst_16 : f32 to vector<8x16xf32>
    %67 = arith.cmpf ogt, %63, %66 : vector<8x16xf32>
    %cst_17 = arith.constant -1.000000e+00 : f32
    %68 = vector.broadcast %cst_17 : f32 to vector<8x16xf32>
    %69 = arith.select %67, %68, %51 : vector<8x16xi1>, vector<8x16xf32>
    %cst_18 = arith.constant dense<0xFF800000> : vector<8xf32>
    %70 = vector.multi_reduction <maximumf>, %69, %cst_18 [1] : vector<8x16xf32> to vector<8xf32>
    %71 = vector.shape_cast %70 : vector<8xf32> to vector<8x1xf32>
    %72 = vector.broadcast %71 : vector<8x1xf32> to vector<8x16xf32>
    %73 = arith.cmpf oge, %69, %72 : vector<8x16xf32>
    %cst_19 = arith.constant 1.600000e+01 : f32
    %74 = vector.broadcast %cst_19 : f32 to vector<8x16xf32>
    %75 = arith.select %73, %32, %74 : vector<8x16xi1>, vector<8x16xf32>
    %cst_20 = arith.constant dense<0x7F800000> : vector<8xf32>
    %76 = vector.multi_reduction <minimumf>, %75, %cst_20 [1] : vector<8x16xf32> to vector<8xf32>
    %77 = vector.shape_cast %76 : vector<8xf32> to vector<8x1xf32>
    %78 = vector.broadcast %77 : vector<8x1xf32> to vector<8x16xf32>
    %79 = arith.cmpf oeq, %32, %78 : vector<8x16xf32>
    %80 = arith.extui %79 : vector<8x16xi1> to vector<8x16xi32>
    %81 = arith.sitofp %80 : vector<8x16xi32> to vector<8x16xf32>
    %82 = math.log %71 : vector<8x1xf32>
    %83 = arith.addf %65, %81 : vector<8x16xf32>
    %84 = arith.addf %35, %53 : vector<8x1xf32>
    %85 = arith.addf %84, %71 : vector<8x1xf32>
    %cst_21 = arith.constant 1.000000e+00 : f32
    %86 = vector.broadcast %cst_21 : f32 to vector<8x1xf32>
    %87 = arith.subf %86, %85 : vector<8x1xf32>
    %cst_22 = arith.constant 0.000000e+00 : f32
    %88 = vector.broadcast %cst_22 : f32 to vector<8x1xf32>
    %89 = arith.maximumf %87, %88 : vector<8x1xf32>
    %cst_23 = arith.constant 0.000000e+00 : f32
    %90 = vector.broadcast %cst_23 : f32 to vector<8x16xf32>
    %91 = arith.cmpf ogt, %83, %90 : vector<8x16xf32>
    %cst_24 = arith.constant -1.000000e+30 : f32
    %92 = vector.broadcast %cst_24 : f32 to vector<8x16xf32>
    %93 = arith.select %91, %92, %23 : vector<8x16xi1>, vector<8x16xf32>
    %94 = arith.addf %93, %4 : vector<8x16xf32>
    %cst_25 = arith.constant dense<0xFF800000> : vector<8xf32>
    %95 = vector.multi_reduction <maximumf>, %94, %cst_25 [1] : vector<8x16xf32> to vector<8xf32>
    %96 = vector.shape_cast %95 : vector<8xf32> to vector<8x1xf32>
    %97 = vector.broadcast %96 : vector<8x1xf32> to vector<8x16xf32>
    %98 = arith.cmpf oge, %94, %97 : vector<8x16xf32>
    %cst_26 = arith.constant 1.600000e+01 : f32
    %99 = vector.broadcast %cst_26 : f32 to vector<8x16xf32>
    %100 = arith.select %98, %32, %99 : vector<8x16xi1>, vector<8x16xf32>
    %cst_27 = arith.constant dense<0x7F800000> : vector<8xf32>
    %101 = vector.multi_reduction <minimumf>, %100, %cst_27 [1] : vector<8x16xf32> to vector<8xf32>
    %102 = vector.shape_cast %101 : vector<8xf32> to vector<8x1xf32>
    %103 = vector.broadcast %102 : vector<8x1xf32> to vector<8x16xf32>
    %104 = arith.cmpf oeq, %32, %103 : vector<8x16xf32>
    %105 = arith.extui %104 : vector<8x16xi1> to vector<8x16xi32>
    %106 = arith.sitofp %105 : vector<8x16xi32> to vector<8x16xf32>
    %107 = arith.mulf %106, %23 : vector<8x16xf32>
    %cst_28 = arith.constant dense<0.000000e+00> : vector<8xf32>
    %108 = vector.multi_reduction <add>, %107, %cst_28 [1] : vector<8x16xf32> to vector<8xf32>
    %109 = vector.shape_cast %108 : vector<8xf32> to vector<8x1xf32>
    %110 = tpu.concatenate %45, %63, %81, %106 in 0 : vector<8x16xf32>, vector<8x16xf32>, vector<8x16xf32>, vector<8x16xf32> -> vector<32x16xf32>
    %111 = tpu.concatenate %3, %3, %3, %3 in 0 : vector<8x16xf32>, vector<8x16xf32>, vector<8x16xf32>, vector<8x16xf32> -> vector<32x16xf32>
    %112 = tpu.concatenate %110, %111 in 1 : vector<32x16xf32>, vector<32x16xf32> -> vector<32x32xf32>
    %cst_29 = arith.constant dense<0.000000e+00> : vector<32x32xf32>
    %113 = tpu.matmul %112, %7, %cst_29 {dimension_numbers = #tpu.dot_dimension_numbers<[1], [0], [0], [1], [0, 0, 1, 1], [], []>} : vector<32x32xf32>, vector<32x32xf32>, vector<32x32xf32> -> vector<32x32xf32>
    %114 = math.tanh %113 : vector<32x32xf32>
    %cst_30 = arith.constant dense<0.000000e+00> : vector<32x10xf32>
    %115 = tpu.matmul %114, %8, %cst_30 {dimension_numbers = #tpu.dot_dimension_numbers<[1], [0], [0], [1], [0, 0, 1, 1], [], []>} : vector<32x32xf32>, vector<32x10xf32>, vector<32x10xf32> -> vector<32x10xf32>
    %116 = vector.broadcast %10 : vector<1x10xf32> to vector<32x10xf32>
    %117 = arith.addf %115, %116 : vector<32x10xf32>
    %cst_31 = arith.constant dense<0xFF800000> : vector<32xf32>
    %118 = vector.multi_reduction <maximumf>, %117, %cst_31 [1] : vector<32x10xf32> to vector<32xf32>
    %119 = vector.shape_cast %118 : vector<32xf32> to vector<32x1xf32>
    %120 = vector.broadcast %119 : vector<32x1xf32> to vector<32x10xf32>
    %121 = arith.subf %117, %120 : vector<32x10xf32>
    %122 = math.exp %121 : vector<32x10xf32>
    %cst_32 = arith.constant dense<0.000000e+00> : vector<32xf32>
    %123 = vector.multi_reduction <add>, %122, %cst_32 [1] : vector<32x10xf32> to vector<32xf32>
    %124 = vector.shape_cast %123 : vector<32xf32> to vector<32x1xf32>
    %125 = math.log %124 : vector<32x1xf32>
    %126 = vector.broadcast %125 : vector<32x1xf32> to vector<32x10xf32>
    %127 = arith.subf %121, %126 : vector<32x10xf32>
    %128 = tpu.iota {dimensions = array<i32: 1>} : vector<8x10xi32>
    %129 = arith.sitofp %128 : vector<8x10xi32> to vector<8x10xf32>
    %130 = vector.broadcast %5 : vector<8x1xf32> to vector<8x10xf32>
    %131 = arith.cmpf oeq, %129, %130 : vector<8x10xf32>
    %132 = arith.extui %131 : vector<8x10xi1> to vector<8x10xi32>
    %133 = arith.sitofp %132 : vector<8x10xi32> to vector<8x10xf32>
    %134 = tpu.concatenate %133, %133, %133, %133 in 0 : vector<8x10xf32>, vector<8x10xf32>, vector<8x10xf32>, vector<8x10xf32> -> vector<32x10xf32>
    %135 = arith.mulf %134, %127 : vector<32x10xf32>
    %cst_33 = arith.constant dense<0.000000e+00> : vector<32xf32>
    %136 = vector.multi_reduction <add>, %135, %cst_33 [1] : vector<32x10xf32> to vector<32xf32>
    %137 = vector.shape_cast %136 : vector<32xf32> to vector<32x1xf32>
    %cst_34 = arith.constant 0.000000e+00 : f32
    %138 = vector.broadcast %cst_34 : f32 to vector<32x1xf32>
    %139 = arith.subf %138, %137 : vector<32x1xf32>
    %140 = vector.extract_strided_slice %117 {offsets = [0, 0], sizes = [8, 10], strides = [1, 1]} : vector<32x10xf32> to vector<8x10xf32>
    %141 = vector.extract_strided_slice %119 {offsets = [0, 0], sizes = [8, 1], strides = [1, 1]} : vector<32x1xf32> to vector<8x1xf32>
    %142 = vector.broadcast %141 : vector<8x1xf32> to vector<8x10xf32>
    %143 = arith.cmpf oge, %140, %142 : vector<8x10xf32>
    %cst_35 = arith.constant 1.000000e+01 : f32
    %144 = vector.broadcast %cst_35 : f32 to vector<8x10xf32>
    %145 = arith.select %143, %129, %144 : vector<8x10xi1>, vector<8x10xf32>
    %cst_36 = arith.constant dense<0x7F800000> : vector<8xf32>
    %146 = vector.multi_reduction <minimumf>, %145, %cst_36 [1] : vector<8x10xf32> to vector<8xf32>
    %147 = vector.shape_cast %146 : vector<8xf32> to vector<8x1xf32>
    %148 = arith.cmpf oeq, %147, %5 : vector<8x1xf32>
    %149 = arith.extui %148 : vector<8x1xi1> to vector<8x1xi32>
    %150 = arith.sitofp %149 : vector<8x1xi32> to vector<8x1xf32>
    %cst_37 = arith.constant 0.000000e+00 : f32
    %151 = vector.broadcast %cst_37 : f32 to vector<8x1xf32>
    %152 = vector.extract_strided_slice %139 {offsets = [0, 0], sizes = [8, 1], strides = [1, 1]} : vector<32x1xf32> to vector<8x1xf32>
    %153 = arith.mulf %152, %46 : vector<8x1xf32>
    %154 = arith.addf %153, %152 : vector<8x1xf32>
    %155 = arith.mulf %154, %35 : vector<8x1xf32>
    %156 = arith.addf %151, %155 : vector<8x1xf32>
    %157 = vector.extract_strided_slice %139 {offsets = [8, 0], sizes = [8, 1], strides = [1, 1]} : vector<32x1xf32> to vector<8x1xf32>
    %158 = arith.mulf %157, %64 : vector<8x1xf32>
    %159 = arith.addf %158, %157 : vector<8x1xf32>
    %160 = arith.mulf %159, %53 : vector<8x1xf32>
    %161 = arith.addf %156, %160 : vector<8x1xf32>
    %162 = vector.extract_strided_slice %139 {offsets = [16, 0], sizes = [8, 1], strides = [1, 1]} : vector<32x1xf32> to vector<8x1xf32>
    %163 = arith.mulf %162, %82 : vector<8x1xf32>
    %164 = arith.addf %163, %162 : vector<8x1xf32>
    %165 = arith.mulf %164, %71 : vector<8x1xf32>
    %166 = arith.addf %161, %165 : vector<8x1xf32>
    %167 = vector.extract_strided_slice %139 {offsets = [24, 0], sizes = [8, 1], strides = [1, 1]} : vector<32x1xf32> to vector<8x1xf32>
    %168 = arith.mulf %167, %109 : vector<8x1xf32>
    %169 = arith.addf %168, %167 : vector<8x1xf32>
    %170 = arith.mulf %169, %89 : vector<8x1xf32>
    %171 = arith.addf %170, %166 : vector<8x1xf32>
    %172 = vector.extract_strided_slice %139 {offsets = [0, 0], sizes = [8, 1], strides = [1, 1]} : vector<32x1xf32> to vector<8x1xf32>
    %173 = tpu.concatenate %171, %30, %172, %150 in 1 : vector<8x1xf32>, vector<8x1xf32>, vector<8x1xf32>, vector<8x1xf32> -> vector<8x4xf32>
    %cst_38 = arith.constant dense<0.000000e+00> : vector<4xf32>
    %174 = vector.multi_reduction <add>, %173, %cst_38 [0] : vector<8x4xf32> to vector<4xf32>
    %175 = vector.shape_cast %174 : vector<4xf32> to vector<1x4xf32>
    %cst_39 = arith.constant 1.250000e-01 : f32
    %176 = vector.broadcast %cst_39 : f32 to vector<1x4xf32>
    %177 = arith.mulf %175, %176 : vector<1x4xf32>
    %178 = vector.extract_strided_slice %177 {offsets = [0, 0], sizes = [1, 1], strides = [1, 1]} : vector<1x4xf32> to vector<1x1xf32>
    %179 = vector.extract_strided_slice %177 {offsets = [0, 1], sizes = [1, 1], strides = [1, 1]} : vector<1x4xf32> to vector<1x1xf32>
    %cst_40 = arith.constant 1.000000e-01 : f32
    %180 = vector.broadcast %cst_40 : f32 to vector<1x1xf32>
    %181 = arith.mulf %180, %179 : vector<1x1xf32>
    %182 = arith.subf %178, %181 : vector<1x1xf32>
    %183 = vector.extract_strided_slice %177 {offsets = [0, 2], sizes = [1, 1], strides = [1, 1]} : vector<1x4xf32> to vector<1x1xf32>
    %184 = vector.extract_strided_slice %177 {offsets = [0, 1], sizes = [1, 1], strides = [1, 1]} : vector<1x4xf32> to vector<1x1xf32>
    %185 = vector.extract_strided_slice %177 {offsets = [0, 3], sizes = [1, 1], strides = [1, 1]} : vector<1x4xf32> to vector<1x1xf32>
    %186 = tpu.concatenate %182, %183, %184, %185 in 1 : vector<1x1xf32>, vector<1x1xf32>, vector<1x1xf32>, vector<1x1xf32> -> vector<1x4xf32>
    %187 = vector.shape_cast %186 : vector<1x4xf32> to vector<1x4xf32>
    %188 = vector.broadcast %187 : vector<1x4xf32> to vector<8x4xf32>
    %cst_41 = arith.constant 0.000000e+00 : f32
    %189 = vector.broadcast %cst_41 : f32 to vector<8x108xf32>
    %190 = tpu.concatenate %25, %188, %189 in 1 : vector<8x16xf32>, vector<8x4xf32>, vector<8x108xf32> -> vector<8x128xf32>
    %c0_42 = arith.constant 0 : index
    %c0_43 = arith.constant 0 : index
    %191 = vector.load %arg2[%c0_42, %c0_43] : memref<8x128xf32, #tpu.memory_space<vmem>>, vector<8x128xf32>
    tpu.vector_store %arg2[%c0_42, %c0_43], %190 {strides = array<i32>} : memref<8x128xf32, #tpu.memory_space<vmem>>, vector<8x128xf32>,
    return
  }
}

</mosaic_0001>

<llo_original>
// kernel: sum_and_sample_forward.1
$region0: #{sum_and_sample_forward.1}
  #allocation0 [shape = 'u32[]', space=smem, size = 0x4, offset = 0x4, fixed_abs, tag = 'smem constant byte address 0x4 - core index']
  #allocation1 [shape = 'u32[144,128]{1,0:T(1,128)}', space=vmem, size = 0x12000, scoped, tag = 'internal scratch']
  %s0 = inlined_call_operand.vmem [shape: f32[8,128], index: 0, kind: input, shape index: {}]
  %s1 = inlined_call_operand.vmem [shape: f32[32,128], index: 1, kind: input, shape index: {}]
  %s2 = inlined_call_operand.vmem [shape: f32[8,128], index: 2, kind: output, shape index: {}]
  %s3 = sld [smem:[#allocation0]]
  $region18: #{sum_and_sample_forward.1} parent=0
    _
  %s5 = ssub.s32 1, %s3
  %s6 = scalar_select 0, %s5, %s3
  // Predicated region
  $region2: #{sum_and_sample_forward.1} parent=0 // pred_check
    _
  $region3: #{sum_and_sample_forward.1} parent=0 // pred_check_branch
    %8 = sbr.rel (0) target = $region5
  $region4: #{sum_and_sample_forward.1} parent=0 // pred_region
    _
  $region5: #{sum_and_sample_forward.1} parent=0 // pred_fallthru
    _
  // Predicated region
  $region6: #{sum_and_sample_forward.1} parent=0 // pred_check
    _
  $region7: #{sum_and_sample_forward.1} parent=0 // pred_check_branch
    %10 = sbr.rel (0) target = $region9
  $region8: #{sum_and_sample_forward.1} parent=0 // pred_region
    _
  $region9: #{sum_and_sample_forward.1} parent=0 // pred_fallthru
    _
  %v11 = vld [vmem:[%s0] sm:$0xff]
  %v12 = vld [vmem:[%s1] sm:$0xff]
  %v13 = vld [vmem:[%s1 + $0x8] sm:$0xff]
  %v14 = vld [vmem:[%s1 + $0x10] sm:$0xff]
  %v15 = vld [vmem:[%s1 + $0x18] sm:$0xff]
  %v16 = vlaneseq
  %v17 = vshrl.u32 %v16, 7
  %v18 = vsub.s32 0, %v17
  %v19 = vrot.slane %v12, %v18
  %21 = vrot.lane.b32.xlu0 %v19, 70
  %v22 = vpop.permute.xlu0 %21
  %vm24 = vcmask 261120
  %v26 = vsel %vm24, %v11, 0
  %28 = vmatprep.subr.mxu0 0.0
  %29 = vmatpush1.msra.mxu0 %v12
  %30 = vmatprep.subr.mxu0 0.0
  %31 = vmatpush1.msra.mxu0 %v13
  %32 = vmatprep.subr.mxu0 0.0
  %33 = vmatpush1.msra.mxu0 %v14
  %34 = vmatprep.subr.mxu0 0.0
  %35 = vmatpush1.msra.mxu0 %v15
  %36 = vmatprep.subr.mxu0 0.0
  %37 = vmatpush1.msra.mxu0 0.0
  %38 = vmatprep.subr.mxu0 0.0
  %39 = vmatpush1.msra.mxu0 0.0
  %40 = vmatprep.subr.mxu0 0.0
  %41 = vmatpush1.msra.mxu0 0.0
  %42 = vmatprep.subr.mxu0 0.0
  %43 = vmatpush1.msra.mxu0 0.0
  %44 = vmatprep.subr.mxu0 0.0
  %45 = vmatpush1.msra.mxu0 0.0
  %46 = vmatprep.subr.mxu0 0.0
  %47 = vmatpush1.msra.mxu0 0.0
  %48 = vmatprep.subr.mxu0 0.0
  %49 = vmatpush1.msra.mxu0 0.0
  %50 = vmatprep.subr.mxu0 0.0
  %51 = vmatpush1.msra.mxu0 0.0
  %52 = vmatprep.subr.mxu0 0.0
  %53 = vmatpush1.msra.mxu0 0.0
  %54 = vmatprep.subr.mxu0 0.0
  %55 = vmatpush1.msra.mxu0 0.0
  %56 = vmatprep.subr.mxu0 0.0
  %57 = vmatpush1.msra.mxu0 0.0
  %58 = vmatprep.subr.mxu0 0.0
  %59 = vmatpush1.msra.mxu0 0.0
  %60 = vmatprep.subr.mxu0 0.0
  %61 = vmatpush1.msra.mxu0 0.0
  %62 = vmatprep.subr.mxu0 0.0
  %63 = vmatpush1.msra.mxu0 0.0
  %64 = vmatprep.subr.mxu0 0.0
  %65 = vmatpush1.msra.mxu0 0.0
  %66 = vmatprep.subr.mxu0 0.0
  %67 = vmatpush1.msra.mxu0 0.0
  %68 = vmatprep.subr.mxu0 0.0
  %69 = vmatpush1.msra.mxu0 0.0
  %70 = vmatprep.subr.mxu0 0.0
  %71 = vmatpush1.msra.mxu0 0.0
  %72 = vmatprep.subr.mxu0 0.0
  %73 = vmatpush1.msra.mxu0 0.0
  %74 = vmatprep.subr.mxu0 0.0
  %75 = vmatpush1.msra.mxu0 0.0
  %76 = vmatprep.subr.mxu0 0.0
  %77 = vmatpush1.msra.mxu0 0.0
  %78 = vmatprep.subr.mxu0 0.0
  %79 = vmatpush1.msra.mxu0 0.0
  %80 = vmatprep.subr.mxu0 0.0
  %81 = vmatpush1.msra.mxu0 0.0
  %82 = vmatprep.subr.mxu0 0.0
  %83 = vmatpush1.msra.mxu0 0.0
  %84 = vmatprep.subr.mxu0 0.0
  %85 = vmatpush1.msra.mxu0 0.0
  %86 = vmatprep.subr.mxu0 0.0
  %87 = vmatpush1.msra.mxu0 0.0
  %88 = vmatprep.subr.mxu0 0.0
  %89 = vmatpush1.msra.mxu0 0.0
  %90 = vmatprep.subr.mxu0 0.0
  %91 = vmatpush1.msra.mxu0 0.0
  %92 = vmatprep.mubr.f32.mxu0 0.0
  %93 = vmatmul.mubr.f32.gmra.mrb[0].mxu0 %v26
  %v94 = vpop.f32.mrb[0].mxu0
  %v95 = vadd.f32 %v22, %v94
  %v96 = vpop.f32.mrb[0].mxu0
  %97 = vdwg.mxu0
  %vm98 = vcmask 130048
  %v99 = vsel %vm98, %v95, -inf
  %100 = vmax.xlane.f32.xlu0 %v99
  %v101 = vpop.xlane.xlu0 %100
  %v102 = vsub.f32 %v95, %v101
  %v103 = vmul.f32 %v102, 1.442695
  %v104 = vpow.pop %v103
  %v105 = vsel %vm98, %v104, 0.0
  %106 = vadd.xlane.f32.xlu0 %v105
  %v107 = vpop.xlane.xlu0 %106
  %v108 = vlog2.pop %v107
  %v109 = vmul.f32 %v108, 0.6931472
  %v110 = vsub.f32 %v102, %v109
  %v111 = vrcp.pop %v107
  %v112 = vmul.f32 %v104, %v111
  %v113 = vmul.f32 %v112, %v110
  %v114 = vsel %vm98, %v113, 0.0
  %115 = vadd.xlane.f32.xlu0 %v114
  %v116 = vpop.xlane.xlu0 %115
  %v117 = vsub.f32 0.0, %v116
  %v118 = vlaneseq
  %v119 = vand.u32 %v118, 127
  %v120 = vcvt.s32.f32 %v119
  %v121 = vsel %vm98, %v112, -inf
  %122 = vmax.xlane.f32.xlu0 %v121
  %v123 = vpop.xlane.xlu0 %122
  %vm124 = vcmp.ge.f32.partialorder %v112, %v123
  %v125 = vsel %vm124, %v120, 16.0
  %v126 = vsel %vm98, %v125, inf
  %127 = vmin.xlane.f32.xlu0 %v126
  %v128 = vpop.xlane.xlu0 %127
  %vm129 = vcmp.eq.f32.partialorder %v120, %v128
  %v130 = vsel %vm129, 1, 0
  %v131 = vcvt.s32.f32 %v130
  %v132 = vlog2.pop %v123
  %v133 = vmul.f32 %v132, 0.6931472
  %v134 = vadd.f32 %v131, 0.0
  %vm135 = vcmp.gt.f32.partialorder %v131, 0.0
  %v136 = vsel %vm135, -1.0, %v112
  %v137 = vsel %vm98, %v136, -inf
  %138 = vmax.xlane.f32.xlu0 %v137
  %v139 = vpop.xlane.xlu0 %138
  %vm140 = vcmp.ge.f32.partialorder %v136, %v139
  %v141 = vsel %vm140, %v120, 16.0
  %v142 = vsel %vm98, %v141, inf
  %143 = vmin.xlane.f32.xlu0 %v142
  %v144 = vpop.xlane.xlu0 %143
  %vm145 = vcmp.eq.f32.partialorder %v120, %v144
  %v146 = vsel %vm145, 1, 0
  %v147 = vcvt.s32.f32 %v146
  %v148 = vlog2.pop %v139
  %v149 = vmul.f32 %v148, 0.6931472
  %v150 = vadd.f32 %v134, %v147
  %vm151 = vcmp.gt.f32.partialorder %v147, 0.0
  %v152 = vsel %vm151, -1.0, %v136
  %v153 = vsel %vm98, %v152, -inf
  %154 = vmax.xlane.f32.xlu0 %v153
  %v155 = vpop.xlane.xlu0 %154
  %vm156 = vcmp.ge.f32.partialorder %v152, %v155
  %v157 = vsel %vm156, %v120, 16.0
  %v158 = vsel %vm98, %v157, inf
  %159 = vmin.xlane.f32.xlu0 %v158
  %v160 = vpop.xlane.xlu0 %159
  %vm161 = vcmp.eq.f32.partialorder %v120, %v160
  %v162 = vsel %vm161, 1, 0
  %v163 = vcvt.s32.f32 %v162
  %v164 = vlog2.pop %v155
  %v165 = vmul.f32 %v164, 0.6931472
  %v166 = vadd.f32 %v150, %v163
  %v167 = vadd.f32 %v123, %v139
  %v168 = vadd.f32 %v167, %v155
  %v169 = vsub.f32 1.0, %v168
  %v170 = vmax.f32 %v169, 0.0
  %vm171 = vcmp.gt.f32.partialorder %v166, 0.0
  %v172 = vsel %vm171, -1e+30, %v110
  %173 = vrot.lane.b32.xlu0 %v11, 80
  %v174 = vpop.permute.xlu0 %173
  %v176 = vadd.f32 %v172, %v174
  %v177 = vsel %vm98, %v176, -inf
  %178 = vmax.xlane.f32.xlu0 %v177
  %v179 = vpop.xlane.xlu0 %178
  %vm180 = vcmp.ge.f32.partialorder %v176, %v179
  %v181 = vsel %vm180, %v120, 16.0
  %v182 = vsel %vm98, %v181, inf
  %183 = vmin.xlane.f32.xlu0 %v182
  %v184 = vpop.xlane.xlu0 %183
  %vm185 = vcmp.eq.f32.partialorder %v120, %v184
  %v186 = vsel %vm185, 1, 0
  %v187 = vcvt.s32.f32 %v186
  %v188 = vmul.f32 %v187, %v110
  %v189 = vsel %vm98, %v188, 0.0
  %190 = vadd.xlane.f32.xlu0 %v189
  %v191 = vpop.xlane.xlu0 %190
  %192 = vrot.lane.b32.xlu0 %v11, 112
  %v193 = vpop.permute.xlu0 %192
  %v195 = vsel %vm98, %v131, %v193
  %v196 = vsel %vm98, %v147, %v193
  %v197 = vsel %vm98, %v163, %v193
  %v198 = vsel %vm98, %v187, %v193
  %203 = vrot.lane.b32.xlu0 %v12, 112
  %v204 = vpop.permute.xlu0 %203
  %205 = vrot.lane.b32.xlu0 %v13, 112
  %v206 = vpop.permute.xlu0 %205
  %207 = vrot.lane.b32.xlu0 %v14, 112
  %v208 = vpop.permute.xlu0 %207
  %209 = vrot.lane.b32.xlu0 %v15, 112
  %v210 = vpop.permute.xlu0 %209
  %v216 = vsel %vm24, %v195, 0
  %v219 = vsel %vm24, %v196, 0
  %v222 = vsel %vm24, %v197, 0
  %v225 = vsel %vm24, %v198, 0
  %227 = vmatprep.subr.mxu0 0.0
  %228 = vmatpush1.msra.mxu0 %v204
  %229 = vmatprep.subr.mxu0 0.0
  %230 = vmatpush1.msra.mxu0 %v206
  %231 = vmatprep.subr.mxu0 0.0
  %232 = vmatpush1.msra.mxu0 %v208
  %233 = vmatprep.subr.mxu0 0.0
  %234 = vmatpush1.msra.mxu0 %v210
  %235 = vmatprep.subr.mxu0 0.0
  %236 = vmatpush1.msra.mxu0 0.0
  %237 = vmatprep.subr.mxu0 0.0
  %238 = vmatpush1.msra.mxu0 0.0
  %239 = vmatprep.subr.mxu0 0.0
  %240 = vmatpush1.msra.mxu0 0.0
  %241 = vmatprep.subr.mxu0 0.0
  %242 = vmatpush1.msra.mxu0 0.0
  %243 = vmatprep.subr.mxu0 0.0
  %244 = vmatpush1.msra.mxu0 0.0
  %245 = vmatprep.subr.mxu0 0.0
  %246 = vmatpush1.msra.mxu0 0.0
  %247 = vmatprep.subr.mxu0 0.0
  %248 = vmatpush1.msra.mxu0 0.0
  %249 = vmatprep.subr.mxu0 0.0
  %250 = vmatpush1.msra.mxu0 0.0
  %251 = vmatprep.subr.mxu0 0.0
  %252 = vmatpush1.msra.mxu0 0.0
  %253 = vmatprep.subr.mxu0 0.0
  %254 = vmatpush1.msra.mxu0 0.0
  %255 = vmatprep.subr.mxu0 0.0
  %256 = vmatpush1.msra.mxu0 0.0
  %257 = vmatprep.subr.mxu0 0.0
  %258 = vmatpush1.msra.mxu0 0.0
  %259 = vmatprep.subr.mxu0 0.0
  %260 = vmatpush1.msra.mxu0 0.0
  %261 = vmatprep.subr.mxu0 0.0
  %262 = vmatpush1.msra.mxu0 0.0
  %263 = vmatprep.subr.mxu0 0.0
  %264 = vmatpush1.msra.mxu0 0.0
  %265 = vmatprep.subr.mxu0 0.0
  %266 = vmatpush1.msra.mxu0 0.0
  %267 = vmatprep.subr.mxu0 0.0
  %268 = vmatpush1.msra.mxu0 0.0
  %269 = vmatprep.subr.mxu0 0.0
  %270 = vmatpush1.msra.mxu0 0.0
  %271 = vmatprep.subr.mxu0 0.0
  %272 = vmatpush1.msra.mxu0 0.0
  %273 = vmatprep.subr.mxu0 0.0
  %274 = vmatpush1.msra.mxu0 0.0
  %275 = vmatprep.subr.mxu0 0.0
  %276 = vmatpush1.msra.mxu0 0.0
  %277 = vmatprep.subr.mxu0 0.0
  %278 = vmatpush1.msra.mxu0 0.0
  %279 = vmatprep.subr.mxu0 0.0
  %280 = vmatpush1.msra.mxu0 0.0
  %281 = vmatprep.subr.mxu0 0.0
  %282 = vmatpush1.msra.mxu0 0.0
  %283 = vmatprep.subr.mxu0 0.0
  %284 = vmatpush1.msra.mxu0 0.0
  %285 = vmatprep.subr.mxu0 0.0
  %286 = vmatpush1.msra.mxu0 0.0
  %287 = vmatprep.subr.mxu0 0.0
  %288 = vmatpush1.msra.mxu0 0.0
  %289 = vmatprep.subr.mxu0 0.0
  %290 = vmatpush1.msra.mxu0 0.0
  %291 = vmatprep.mubr.f32.mxu0 0.0
  %292 = vmatmul.mubr.f32.gmra.mrb[0].mxu0 %v216
  %v293 = vpop.f32.mrb[0].mxu0
  %v294 = vadd.f32 0.0, %v293
  %v295 = vpop.f32.mrb[0].mxu0
  %296 = vmatprep.mubr.f32.mxu0 0.0
  %297 = vmatmul.mubr.f32.gmra.mrb[0].mxu0 %v219
  %v298 = vpop.f32.mrb[0].mxu0
  %v299 = vadd.f32 0.0, %v298
  %v300 = vpop.f32.mrb[0].mxu0
  %301 = vmatprep.mubr.f32.mxu0 0.0
  %302 = vmatmul.mubr.f32.gmra.mrb[0].mxu0 %v222
  %v303 = vpop.f32.mrb[0].mxu0
  %v304 = vadd.f32 0.0, %v303
  %v305 = vpop.f32.mrb[0].mxu0
  %306 = vmatprep.mubr.f32.mxu0 0.0
  %307 = vmatmul.mubr.f32.gmra.mrb[0].mxu0 %v225
  %v308 = vpop.f32.mrb[0].mxu0
  %v309 = vadd.f32 0.0, %v308
  %v310 = vpop.f32.mrb[0].mxu0
  %311 = vdwg.mxu0
  %v312 = vtanh.pop %v294
  %v313 = vtanh.pop %v299
  %v314 = vtanh.pop %v304
  %v315 = vtanh.pop %v309
  %316 = vrot.lane.b32.xlu0 %v12, 80
  %v317 = vpop.permute.xlu0 %316
  %318 = vrot.lane.b32.xlu0 %v13, 80
  %v319 = vpop.permute.xlu0 %318
  %320 = vrot.lane.b32.xlu0 %v14, 80
  %v321 = vpop.permute.xlu0 %320
  %322 = vrot.lane.b32.xlu0 %v15, 80
  %v323 = vpop.permute.xlu0 %322
  %328 = vrot.lane.b32.xlu0 %v19, 54
  %v329 = vpop.permute.xlu0 %328
  %v332 = vsel %vm24, %v312, 0
  %v335 = vsel %vm24, %v313, 0
  %v338 = vsel %vm24, %v314, 0
  %v341 = vsel %vm24, %v315, 0
  %343 = vmatprep.subr.mxu0 0.0
  %344 = vmatpush1.msra.mxu0 %v317
  %345 = vmatprep.subr.mxu0 0.0
  %346 = vmatpush1.msra.mxu0 %v319
  %347 = vmatprep.subr.mxu0 0.0
  %348 = vmatpush1.msra.mxu0 %v321
  %349 = vmatprep.subr.mxu0 0.0
  %350 = vmatpush1.msra.mxu0 %v323
  %351 = vmatprep.subr.mxu0 0.0
  %352 = vmatpush1.msra.mxu0 0.0
  %353 = vmatprep.subr.mxu0 0.0
  %354 = vmatpush1.msra.mxu0 0.0
  %355 = vmatprep.subr.mxu0 0.0
  %356 = vmatpush1.msra.mxu0 0.0
  %357 = vmatprep.subr.mxu0 0.0
  %358 = vmatpush1.msra.mxu0 0.0
  %359 = vmatprep.subr.mxu0 0.0
  %360 = vmatpush1.msra.mxu0 0.0
  %361 = vmatprep.subr.mxu0 0.0
  %362 = vmatpush1.msra.mxu0 0.0
  %363 = vmatprep.subr.mxu0 0.0
  %364 = vmatpush1.msra.mxu0 0.0
  %365 = vmatprep.subr.mxu0 0.0
  %366 = vmatpush1.msra.mxu0 0.0
  %367 = vmatprep.subr.mxu0 0.0
  %368 = vmatpush1.msra.mxu0 0.0
  %369 = vmatprep.subr.mxu0 0.0
  %370 = vmatpush1.msra.mxu0 0.0
  %371 = vmatprep.subr.mxu0 0.0
  %372 = vmatpush1.msra.mxu0 0.0
  %373 = vmatprep.subr.mxu0 0.0
  %374 = vmatpush1.msra.mxu0 0.0
  %375 = vmatprep.subr.mxu0 0.0
  %376 = vmatpush1.msra.mxu0 0.0
  %377 = vmatprep.subr.mxu0 0.0
  %378 = vmatpush1.msra.mxu0 0.0
  %379 = vmatprep.subr.mxu0 0.0
  %380 = vmatpush1.msra.mxu0 0.0
  %381 = vmatprep.subr.mxu0 0.0
  %382 = vmatpush1.msra.mxu0 0.0
  %383 = vmatprep.subr.mxu0 0.0
  %384 = vmatpush1.msra.mxu0 0.0
  %385 = vmatprep.subr.mxu0 0.0
  %386 = vmatpush1.msra.mxu0 0.0
  %387 = vmatprep.subr.mxu0 0.0
  %388 = vmatpush1.msra.mxu0 0.0
  %389 = vmatprep.subr.mxu0 0.0
  %390 = vmatpush1.msra.mxu0 0.0
  %391 = vmatprep.subr.mxu0 0.0
  %392 = vmatpush1.msra.mxu0 0.0
  %393 = vmatprep.subr.mxu0 0.0
  %394 = vmatpush1.msra.mxu0 0.0
  %395 = vmatprep.subr.mxu0 0.0
  %396 = vmatpush1.msra.mxu0 0.0
  %397 = vmatprep.subr.mxu0 0.0
  %398 = vmatpush1.msra.mxu0 0.0
  %399 = vmatprep.subr.mxu0 0.0
  %400 = vmatpush1.msra.mxu0 0.0
  %401 = vmatprep.subr.mxu0 0.0
  %402 = vmatpush1.msra.mxu0 0.0
  %403 = vmatprep.subr.mxu0 0.0
  %404 = vmatpush1.msra.mxu0 0.0
  %405 = vmatprep.subr.mxu0 0.0
  %406 = vmatpush1.msra.mxu0 0.0
  %407 = vmatprep.mubr.f32.mxu0 0.0
  %408 = vmatmul.mubr.f32.gmra.mrb[0].mxu0 %v332
  %v409 = vpop.f32.mrb[0].mxu0
  %v410 = vadd.f32 %v329, %v409
  %v411 = vpop.f32.mrb[0].mxu0
  %412 = vmatprep.mubr.f32.mxu0 0.0
  %413 = vmatmul.mubr.f32.gmra.mrb[0].mxu0 %v335
  %v414 = vpop.f32.mrb[0].mxu0
  %v415 = vadd.f32 %v329, %v414
  %v416 = vpop.f32.mrb[0].mxu0
  %417 = vmatprep.mubr.f32.mxu0 0.0
  %418 = vmatmul.mubr.f32.gmra.mrb[0].mxu0 %v338
  %v419 = vpop.f32.mrb[0].mxu0
  %v420 = vadd.f32 %v329, %v419
  %v421 = vpop.f32.mrb[0].mxu0
  %422 = vmatprep.mubr.f32.mxu0 0.0
  %423 = vmatmul.mubr.f32.gmra.mrb[0].mxu0 %v341
  %v424 = vpop.f32.mrb[0].mxu0
  %v425 = vadd.f32 %v329, %v424
  %v426 = vpop.f32.mrb[0].mxu0
  %427 = vdwg.mxu0
  %vm428 = vcmask 80896
  %v429 = vsel %vm428, %v410, -inf
  %430 = vmax.xlane.f32.xlu0 %v429
  %v431 = vpop.xlane.xlu0 %430
  %v432 = vsel %vm428, %v415, -inf
  %433 = vmax.xlane.f32.xlu0 %v432
  %v434 = vpop.xlane.xlu0 %433
  %v435 = vsel %vm428, %v420, -inf
  %436 = vmax.xlane.f32.xlu0 %v435
  %v437 = vpop.xlane.xlu0 %436
  %v438 = vsel %vm428, %v425, -inf
  %439 = vmax.xlane.f32.xlu0 %v438
  %v440 = vpop.xlane.xlu0 %439
  %v441 = vsub.f32 %v410, %v431
  %v442 = vsub.f32 %v415, %v434
  %v443 = vsub.f32 %v420, %v437
  %v444 = vsub.f32 %v425, %v440
  %v445 = vmul.f32 %v441, 1.442695
  %v446 = vpow.pop %v445
  %v447 = vmul.f32 %v442, 1.442695
  %v448 = vpow.pop %v447
  %v449 = vmul.f32 %v443, 1.442695
  %v450 = vpow.pop %v449
  %v451 = vmul.f32 %v444, 1.442695
  %v452 = vpow.pop %v451
  %v453 = vsel %vm428, %v446, 0.0
  %454 = vadd.xlane.f32.xlu0 %v453
  %v455 = vpop.xlane.xlu0 %454
  %v456 = vsel %vm428, %v448, 0.0
  %457 = vadd.xlane.f32.xlu0 %v456
  %v458 = vpop.xlane.xlu0 %457
  %v459 = vsel %vm428, %v450, 0.0
  %460 = vadd.xlane.f32.xlu0 %v459
  %v461 = vpop.xlane.xlu0 %460
  %v462 = vsel %vm428, %v452, 0.0
  %463 = vadd.xlane.f32.xlu0 %v462
  %v464 = vpop.xlane.xlu0 %463
  %v465 = vlog2.pop %v455
  %v466 = vmul.f32 %v465, 0.6931472
  %v467 = vlog2.pop %v458
  %v468 = vmul.f32 %v467, 0.6931472
  %v469 = vlog2.pop %v461
  %v470 = vmul.f32 %v469, 0.6931472
  %v471 = vlog2.pop %v464
  %v472 = vmul.f32 %v471, 0.6931472
  %v473 = vsub.f32 %v441, %v466
  %v474 = vsub.f32 %v442, %v468
  %v475 = vsub.f32 %v443, %v470
  %v476 = vsub.f32 %v444, %v472
  %477 = vset.pattern.permute.xlu0 64
  %478 = vperm.xlu0 %477, %v11
  %v479 = vpop.permute.xlu0 %478
  %vm481 = vcmp.eq.f32.partialorder %v120, %v479
  %v482 = vsel %vm481, 1, 0
  %v483 = vcvt.s32.f32 %v482
  %v484 = vmul.f32 %v483, %v473
  %v485 = vmul.f32 %v483, %v474
  %v486 = vmul.f32 %v483, %v475
  %v487 = vmul.f32 %v483, %v476
  %v488 = vsel %vm428, %v484, 0.0
  %489 = vadd.xlane.f32.xlu0 %v488
  %v490 = vpop.xlane.xlu0 %489
  %v491 = vsel %vm428, %v485, 0.0
  %492 = vadd.xlane.f32.xlu0 %v491
  %v493 = vpop.xlane.xlu0 %492
  %v494 = vsel %vm428, %v486, 0.0
  %495 = vadd.xlane.f32.xlu0 %v494
  %v496 = vpop.xlane.xlu0 %495
  %v497 = vsel %vm428, %v487, 0.0
  %498 = vadd.xlane.f32.xlu0 %v497
  %v499 = vpop.xlane.xlu0 %498
  %v500 = vsub.f32 0.0, %v490
  %v501 = vsub.f32 0.0, %v493
  %v502 = vsub.f32 0.0, %v496
  %v503 = vsub.f32 0.0, %v499
  %vm504 = vcmp.ge.f32.partialorder %v410, %v431
  %v505 = vsel %vm504, %v120, 10.0
  %v506 = vsel %vm428, %v505, inf
  %507 = vmin.xlane.f32.xlu0 %v506
  %v508 = vpop.xlane.xlu0 %507
  %vm509 = vcmp.eq.f32.partialorder %v508, %v11
  %v510 = vsel %vm509, 1, 0
  %v511 = vcvt.s32.f32 %v510
  %v512 = vmul.f32 %v500, %v133
  %v513 = vadd.f32 %v512, %v500
  %v514 = vmul.f32 %v513, %v123
  %v515 = vadd.f32 %v514, 0.0
  %v516 = vmul.f32 %v501, %v149
  %v517 = vadd.f32 %v516, %v501
  %v518 = vmul.f32 %v517, %v139
  %v519 = vadd.f32 %v515, %v518
  %v520 = vmul.f32 %v502, %v165
  %v521 = vadd.f32 %v520, %v502
  %v522 = vmul.f32 %v521, %v155
  %v523 = vadd.f32 %v519, %v522
  %v524 = vmul.f32 %v503, %v191
  %v525 = vadd.f32 %v524, %v503
  %v526 = vmul.f32 %v525, %v170
  %v527 = vadd.f32 %v526, %v523
  %529 = vrot.lane.b32.xlu0 %v511, 67
  %v530 = vpop.permute.xlu0 %529
  %vm532 = vcmask 7168
  %v533 = vsel %vm532, %v527, %v117
  %vm534 = vcmask 15360
  %v535 = vsel %vm534, %v533, %v500
  %vm536 = vcmask 23552
  %v537 = vsel %vm536, %v535, %v530
  %vm538 = vcmask 31744
  %v539 = vsel %vm538, %v537, 0.0
  %v540 = vrot.slane %v539, 4
  %v541 = vadd.f32 %v539, %v540
  %v542 = vrot.slane %v541, 2
  %v543 = vadd.f32 %v541, %v542
  %v544 = vrot.slane %v543, 1
  %v545 = vadd.f32 %v543, %v544
  %v546 = vmul.f32 %v545, 0.125
  %v547 = vmul.f32 %v546, 0.1
  %549 = vrot.lane.b32.xlu0 %v547, 127
  %v550 = vpop.permute.xlu0 %549
  %v552 = vsub.f32 %v546, %v550
  %554 = vrot.lane.b32.xlu0 %v546, 127
  %v555 = vpop.permute.xlu0 %554
  %557 = vrot.lane.b32.xlu0 %v546, 1
  %v558 = vpop.permute.xlu0 %557
  %v560 = vsel %vm532, %v552, %v555
  %v561 = vsel %vm534, %v560, %v558
  %v562 = vsel %vm536, %v561, %v546
  %v563 = vlaneseq
  %v564 = vshrl.u32 %v563, 7
  %v565 = vsub.s32 0, %v564
  %v566 = vrot.slane %v562, %v565
  %568 = vrot.lane.b32.xlu0 %v566, 16
  %v569 = vpop.permute.xlu0 %568
  %v571 = vsel %vm98, %v112, %v569
  %vm572 = vcmask 162816
  %v573 = vsel %vm572, %v571, 0.0
  %574 = vst [vmem:[%s2] sm:$0xff] %v573
  // Predicated region
  $region10: #{sum_and_sample_forward.1} parent=0 // pred_check
    _
  $region11: #{sum_and_sample_forward.1} parent=0 // pred_check_branch
    %576 = sbr.rel (0) target = $region13
  $region12: #{sum_and_sample_forward.1} parent=0 // pred_region
    _
  $region13: #{sum_and_sample_forward.1} parent=0 // pred_fallthru
    _
  // Predicated region
  $region14: #{sum_and_sample_forward.1} parent=0 // pred_check
    _
  $region15: #{sum_and_sample_forward.1} parent=0 // pred_check_branch
    %578 = sbr.rel (0) target = $region17
  $region16: #{sum_and_sample_forward.1} parent=0 // pred_region
    _
  $region17: #{sum_and_sample_forward.1} parent=0 // pred_fallthru
    _

</llo_original>
